<compile_context>
chip_gen: v6e
topology: v6e:2x2x1
jax: 0.10.0
libtpu: 0.0.40
codegen_flags: <defaults>
</compile_context>

<pallas_src>
import functools

import jax
import jax.numpy as jnp
from jax.experimental import pallas as pl
from jax.experimental.pallas import tpu as pltpu

N_CLASSES = 91
LANES = 128


def _miou_count_kernel(xt_ref, inter_ref, total_ref, *, block_rows, cls_sub):
    # xt_ref   : (2, block_rows, 128) int32 — [0]=preds, [1]=targets, dense.
    # inter_ref: (cls_sub, 128) int32 — per-class (sublane) per-lane intersections.
    # total_ref: (cls_sub, 128) int32 — per-class per-lane |a|+|b| counts.
    s = pl.program_id(1)

    # Class ids vary along sublanes, constant along lanes: cls[c, l] = c.
    cls = jax.lax.broadcasted_iota(jnp.int32, (cls_sub, LANES), 0)

    def row_body(r, carry):
        acc_i, acc_t = carry
        xr = xt_ref[0, pl.ds(r, 1), :]                       # (1, 128)
        tr = xt_ref[1, pl.ds(r, 1), :]                       # (1, 128)
        xb = jnp.broadcast_to(xr, (cls_sub, LANES))          # sublane broadcast
        tb = jnp.broadcast_to(tr, (cls_sub, LANES))
        ai = (xb == cls).astype(jnp.int32)                   # one-hot(pred)
        bi = (tb == cls).astype(jnp.int32)                   # one-hot(target)
        acc_i = acc_i + ai * bi                              # intersection
        acc_t = acc_t + (ai + bi)                            # total = |a| + |b|
        return acc_i, acc_t

    zero = jnp.zeros((cls_sub, LANES), jnp.int32)
    acc_i, acc_t = jax.lax.fori_loop(
        0, block_rows, row_body, (zero, zero), unroll=8)

    @pl.when(s == 0)
    def _():
        inter_ref[...] = acc_i
        total_ref[...] = acc_t

    @pl.when(s != 0)
    def _():
        inter_ref[...] += acc_i
        total_ref[...] += acc_t


def miou_estimator(inputs, targets, n_classes=N_CLASSES, smooth=1.0,
                   block_rows=256, splits=2):
    """Pallas implementation of mIoUEstimator.forward."""
    x = inputs.reshape(-1).astype(jnp.int32)
    t = targets.reshape(-1).astype(jnp.int32)
    n = x.shape[0]

    cls_sub = pl.cdiv(n_classes, 8) * 8                      # 91 -> 96 sublanes

    # Static tiling: block_rows rows of 128 elements per grid step; shrink the
    # block for tiny inputs so we don't pay for pure-padding work.
    rows_needed = max(1, pl.cdiv(pl.cdiv(n, splits), LANES))
    block_rows = max(8, min(block_rows, pl.cdiv(rows_needed, 8) * 8))
    steps = pl.cdiv(rows_needed, block_rows)
    total_rows = splits * steps * block_rows
    n_pad = total_rows * LANES
    pad = n_pad - n

    # Pad with -1 so padded elements never match any class id (>= 0).
    x = jnp.pad(x, (0, pad), constant_values=-1)
    t = jnp.pad(t, (0, pad), constant_values=-1)
    xt = jnp.stack([x, t]).reshape(2, total_rows, LANES)     # one dense input

    kernel = functools.partial(
        _miou_count_kernel, block_rows=block_rows, cls_sub=cls_sub)

    inter_p, total_p = pl.pallas_call(
        kernel,
        out_shape=(
            jax.ShapeDtypeStruct((splits * cls_sub, LANES), jnp.int32),
            jax.ShapeDtypeStruct((splits * cls_sub, LANES), jnp.int32),
        ),
        grid_spec=pltpu.PrefetchScalarGridSpec(
            num_scalar_prefetch=0,
            grid=(splits, steps),
            in_specs=[
                pl.BlockSpec((2, block_rows, LANES),
                             lambda g, s: (0, g * steps + s, 0)),
            ],
            out_specs=[
                pl.BlockSpec((cls_sub, LANES), lambda g, s: (g, 0)),
                pl.BlockSpec((cls_sub, LANES), lambda g, s: (g, 0)),
            ],
        ),
        compiler_params=pltpu.CompilerParams(
            dimension_semantics=("parallel", "arbitrary"),
        ),
    )(xt)

    # Tiny epilogue in plain JAX: collapse lanes + splits, then IoU + mean.
    inter = inter_p.reshape(splits, cls_sub, LANES).sum(axis=(0, 2))
    total = total_p.reshape(splits, cls_sub, LANES).sum(axis=(0, 2))
    inter = inter[:n_classes].astype(jnp.float32)
    total = total[:n_classes].astype(jnp.float32)
    union = total - inter
    valid = union != 0.0
    iou = (inter + smooth) / (union + smooth)
    sum_iou = jnp.sum(jnp.where(valid, iou, 0.0))
    num = jnp.sum(valid.astype(jnp.float32))
    # Matches the PyTorch module: division is undefined (NaN here) if no class
    # has a nonzero union.
    return sum_iou / num


def miou_reference(inputs, targets, n_classes=N_CLASSES, smooth=1.0):
    """Plain-JAX reference matching the PyTorch loop semantics."""
    x = inputs.reshape(-1)
    t = targets.reshape(-1)
    sum_iou = jnp.float32(0.0)
    num = jnp.float32(0.0)
    for i in range(n_classes):
        a = (x == i).astype(jnp.float32)
        b = (t == i).astype(jnp.float32)
        inter = jnp.sum(a * b)
        total = jnp.sum(a + b)
        union = total - inter
        valid = union != 0.0
        sum_iou = sum_iou + jnp.where(valid, (inter + smooth) / (union + smooth), 0.0)
        num = num + jnp.where(valid, 1.0, 0.0)
    return sum_iou / num


if __name__ == "__main__":
    key = jax.random.PRNGKey(0)
    k1, k2 = jax.random.split(key)
    # Integer segmentation label maps: batch=2, spatial=16x16, classes in [0, 91)
    inputs = jax.random.randint(k1, (2, 16, 16), 0, N_CLASSES, dtype=jnp.int32)
    targets = jax.random.randint(k2, (2, 16, 16), 0, N_CLASSES, dtype=jnp.int32)

    out = miou_estimator(inputs, targets)
    jax.block_until_ready(out)

    ref = miou_reference(inputs, targets)
    assert jnp.allclose(out, ref, rtol=1e-5, atol=1e-5), (out, ref)
    print("KERNEL_OK")
</pallas_src>

<mosaic_0001>
module attributes {stable_mosaic.version = 11 : i64} {
  func.func @_miou_count_kernel(%arg0: i32, %arg1: i32, %arg2: memref<2x8x128xi32, #tpu.memory_space<vmem>>, %arg3: memref<96x128xi32, #tpu.memory_space<vmem>>, %arg4: memref<96x128xi32, #tpu.memory_space<vmem>>) attributes {dimension_semantics = [#tpu.dimension_semantics<parallel>, #tpu.dimension_semantics<arbitrary>], iteration_bounds = array<i64: 2, 1>, scalar_prefetch = 0 : i64, scratch_operands = 0 : i64, tpu.core_type = #tpu.core_type<tc>, window_params = [{transform_indices = @transform_0, window_bounds = array<i64: 2, 8, 128>}, {transform_indices = @transform_1, window_bounds = array<i64: 96, 128>}, {transform_indices = @transform_2, window_bounds = array<i64: 96, 128>}]} {
    %0 = tpu.iota {dimensions = array<i32: 0>} : vector<96x128xi32>
    %c0_i32 = arith.constant 0 : i32
    %1 = vector.broadcast %c0_i32 : i32 to vector<96x128xi32>
    %c0_i32_0 = arith.constant 0 : i32
    %c0 = arith.constant 0 : index
    %2 = arith.index_cast %c0_i32_0 : i32 to index
    %c0_1 = arith.constant 0 : index
    %3 = vector.load %arg2[%c0, %2, %c0_1] : memref<2x8x128xi32, #tpu.memory_space<vmem>>, vector<1x1x128xi32>
    %4 = vector.shape_cast %3 : vector<1x1x128xi32> to vector<1x128xi32>
    %c1 = arith.constant 1 : index
    %5 = arith.index_cast %c0_i32_0 : i32 to index
    %c0_2 = arith.constant 0 : index
    %6 = vector.load %arg2[%c1, %5, %c0_2] : memref<2x8x128xi32, #tpu.memory_space<vmem>>, vector<1x1x128xi32>
    %7 = vector.shape_cast %6 : vector<1x1x128xi32> to vector<1x128xi32>
    %8 = vector.shape_cast %4 : vector<1x128xi32> to vector<1x128xi32>
    %9 = vector.broadcast %8 : vector<1x128xi32> to vector<96x128xi32>
    %10 = vector.shape_cast %7 : vector<1x128xi32> to vector<1x128xi32>
    %11 = vector.broadcast %10 : vector<1x128xi32> to vector<96x128xi32>
    %12 = arith.cmpi eq, %9, %0 : vector<96x128xi32>
    %13 = arith.extui %12 : vector<96x128xi1> to vector<96x128xi32>
    %14 = arith.cmpi eq, %11, %0 : vector<96x128xi32>
    %15 = arith.extui %14 : vector<96x128xi1> to vector<96x128xi32>
    %16 = arith.muli %13, %15 : vector<96x128xi32>
    %17 = arith.addi %1, %16 : vector<96x128xi32>
    %18 = arith.addi %13, %15 : vector<96x128xi32>
    %19 = arith.addi %1, %18 : vector<96x128xi32>
    %c1_i32 = arith.constant 1 : i32
    %c0_3 = arith.constant 0 : index
    %20 = arith.index_cast %c1_i32 : i32 to index
    %c0_4 = arith.constant 0 : index
    %21 = vector.load %arg2[%c0_3, %20, %c0_4] : memref<2x8x128xi32, #tpu.memory_space<vmem>>, vector<1x1x128xi32>
    %22 = vector.shape_cast %21 : vector<1x1x128xi32> to vector<1x128xi32>
    %c1_5 = arith.constant 1 : index
    %23 = arith.index_cast %c1_i32 : i32 to index
    %c0_6 = arith.constant 0 : index
    %24 = vector.load %arg2[%c1_5, %23, %c0_6] : memref<2x8x128xi32, #tpu.memory_space<vmem>>, vector<1x1x128xi32>
    %25 = vector.shape_cast %24 : vector<1x1x128xi32> to vector<1x128xi32>
    %26 = vector.shape_cast %22 : vector<1x128xi32> to vector<1x128xi32>
    %27 = vector.broadcast %26 : vector<1x128xi32> to vector<96x128xi32>
    %28 = vector.shape_cast %25 : vector<1x128xi32> to vector<1x128xi32>
    %29 = vector.broadcast %28 : vector<1x128xi32> to vector<96x128xi32>
    %30 = arith.cmpi eq, %27, %0 : vector<96x128xi32>
    %31 = arith.extui %30 : vector<96x128xi1> to vector<96x128xi32>
    %32 = arith.cmpi eq, %29, %0 : vector<96x128xi32>
    %33 = arith.extui %32 : vector<96x128xi1> to vector<96x128xi32>
    %34 = arith.muli %31, %33 : vector<96x128xi32>
    %35 = arith.addi %17, %34 : vector<96x128xi32>
    %36 = arith.addi %31, %33 : vector<96x128xi32>
    %37 = arith.addi %19, %36 : vector<96x128xi32>
    %c2_i32 = arith.constant 2 : i32
    %c0_7 = arith.constant 0 : index
    %38 = arith.index_cast %c2_i32 : i32 to index
    %c0_8 = arith.constant 0 : index
    %39 = vector.load %arg2[%c0_7, %38, %c0_8] : memref<2x8x128xi32, #tpu.memory_space<vmem>>, vector<1x1x128xi32>
    %40 = vector.shape_cast %39 : vector<1x1x128xi32> to vector<1x128xi32>
    %c1_9 = arith.constant 1 : index
    %41 = arith.index_cast %c2_i32 : i32 to index
    %c0_10 = arith.constant 0 : index
    %42 = vector.load %arg2[%c1_9, %41, %c0_10] : memref<2x8x128xi32, #tpu.memory_space<vmem>>, vector<1x1x128xi32>
    %43 = vector.shape_cast %42 : vector<1x1x128xi32> to vector<1x128xi32>
    %44 = vector.shape_cast %40 : vector<1x128xi32> to vector<1x128xi32>
    %45 = vector.broadcast %44 : vector<1x128xi32> to vector<96x128xi32>
    %46 = vector.shape_cast %43 : vector<1x128xi32> to vector<1x128xi32>
    %47 = vector.broadcast %46 : vector<1x128xi32> to vector<96x128xi32>
    %48 = arith.cmpi eq, %45, %0 : vector<96x128xi32>
    %49 = arith.extui %48 : vector<96x128xi1> to vector<96x128xi32>
    %50 = arith.cmpi eq, %47, %0 : vector<96x128xi32>
    %51 = arith.extui %50 : vector<96x128xi1> to vector<96x128xi32>
    %52 = arith.muli %49, %51 : vector<96x128xi32>
    %53 = arith.addi %35, %52 : vector<96x128xi32>
    %54 = arith.addi %49, %51 : vector<96x128xi32>
    %55 = arith.addi %37, %54 : vector<96x128xi32>
    %c3_i32 = arith.constant 3 : i32
    %c0_11 = arith.constant 0 : index
    %56 = arith.index_cast %c3_i32 : i32 to index
    %c0_12 = arith.constant 0 : index
    %57 = vector.load %arg2[%c0_11, %56, %c0_12] : memref<2x8x128xi32, #tpu.memory_space<vmem>>, vector<1x1x128xi32>
    %58 = vector.shape_cast %57 : vector<1x1x128xi32> to vector<1x128xi32>
    %c1_13 = arith.constant 1 : index
    %59 = arith.index_cast %c3_i32 : i32 to index
    %c0_14 = arith.constant 0 : index
    %60 = vector.load %arg2[%c1_13, %59, %c0_14] : memref<2x8x128xi32, #tpu.memory_space<vmem>>, vector<1x1x128xi32>
    %61 = vector.shape_cast %60 : vector<1x1x128xi32> to vector<1x128xi32>
    %62 = vector.shape_cast %58 : vector<1x128xi32> to vector<1x128xi32>
    %63 = vector.broadcast %62 : vector<1x128xi32> to vector<96x128xi32>
    %64 = vector.shape_cast %61 : vector<1x128xi32> to vector<1x128xi32>
    %65 = vector.broadcast %64 : vector<1x128xi32> to vector<96x128xi32>
    %66 = arith.cmpi eq, %63, %0 : vector<96x128xi32>
    %67 = arith.extui %66 : vector<96x128xi1> to vector<96x128xi32>
    %68 = arith.cmpi eq, %65, %0 : vector<96x128xi32>
    %69 = arith.extui %68 : vector<96x128xi1> to vector<96x128xi32>
    %70 = arith.muli %67, %69 : vector<96x128xi32>
    %71 = arith.addi %53, %70 : vector<96x128xi32>
    %72 = arith.addi %67, %69 : vector<96x128xi32>
    %73 = arith.addi %55, %72 : vector<96x128xi32>
    %c4_i32 = arith.constant 4 : i32
    %c0_15 = arith.constant 0 : index
    %74 = arith.index_cast %c4_i32 : i32 to index
    %c0_16 = arith.constant 0 : index
    %75 = vector.load %arg2[%c0_15, %74, %c0_16] : memref<2x8x128xi32, #tpu.memory_space<vmem>>, vector<1x1x128xi32>
    %76 = vector.shape_cast %75 : vector<1x1x128xi32> to vector<1x128xi32>
    %c1_17 = arith.constant 1 : index
    %77 = arith.index_cast %c4_i32 : i32 to index
    %c0_18 = arith.constant 0 : index
    %78 = vector.load %arg2[%c1_17, %77, %c0_18] : memref<2x8x128xi32, #tpu.memory_space<vmem>>, vector<1x1x128xi32>
    %79 = vector.shape_cast %78 : vector<1x1x128xi32> to vector<1x128xi32>
    %80 = vector.shape_cast %76 : vector<1x128xi32> to vector<1x128xi32>
    %81 = vector.broadcast %80 : vector<1x128xi32> to vector<96x128xi32>
    %82 = vector.shape_cast %79 : vector<1x128xi32> to vector<1x128xi32>
    %83 = vector.broadcast %82 : vector<1x128xi32> to vector<96x128xi32>
    %84 = arith.cmpi eq, %81, %0 : vector<96x128xi32>
    %85 = arith.extui %84 : vector<96x128xi1> to vector<96x128xi32>
    %86 = arith.cmpi eq, %83, %0 : vector<96x128xi32>
    %87 = arith.extui %86 : vector<96x128xi1> to vector<96x128xi32>
    %88 = arith.muli %85, %87 : vector<96x128xi32>
    %89 = arith.addi %71, %88 : vector<96x128xi32>
    %90 = arith.addi %85, %87 : vector<96x128xi32>
    %91 = arith.addi %73, %90 : vector<96x128xi32>
    %c5_i32 = arith.constant 5 : i32
    %c0_19 = arith.constant 0 : index
    %92 = arith.index_cast %c5_i32 : i32 to index
    %c0_20 = arith.constant 0 : index
    %93 = vector.load %arg2[%c0_19, %92, %c0_20] : memref<2x8x128xi32, #tpu.memory_space<vmem>>, vector<1x1x128xi32>
    %94 = vector.shape_cast %93 : vector<1x1x128xi32> to vector<1x128xi32>
    %c1_21 = arith.constant 1 : index
    %95 = arith.index_cast %c5_i32 : i32 to index
    %c0_22 = arith.constant 0 : index
    %96 = vector.load %arg2[%c1_21, %95, %c0_22] : memref<2x8x128xi32, #tpu.memory_space<vmem>>, vector<1x1x128xi32>
    %97 = vector.shape_cast %96 : vector<1x1x128xi32> to vector<1x128xi32>
    %98 = vector.shape_cast %94 : vector<1x128xi32> to vector<1x128xi32>
    %99 = vector.broadcast %98 : vector<1x128xi32> to vector<96x128xi32>
    %100 = vector.shape_cast %97 : vector<1x128xi32> to vector<1x128xi32>
    %101 = vector.broadcast %100 : vector<1x128xi32> to vector<96x128xi32>
    %102 = arith.cmpi eq, %99, %0 : vector<96x128xi32>
    %103 = arith.extui %102 : vector<96x128xi1> to vector<96x128xi32>
    %104 = arith.cmpi eq, %101, %0 : vector<96x128xi32>
    %105 = arith.extui %104 : vector<96x128xi1> to vector<96x128xi32>
    %106 = arith.muli %103, %105 : vector<96x128xi32>
    %107 = arith.addi %89, %106 : vector<96x128xi32>
    %108 = arith.addi %103, %105 : vector<96x128xi32>
    %109 = arith.addi %91, %108 : vector<96x128xi32>
    %c6_i32 = arith.constant 6 : i32
    %c0_23 = arith.constant 0 : index
    %110 = arith.index_cast %c6_i32 : i32 to index
    %c0_24 = arith.constant 0 : index
    %111 = vector.load %arg2[%c0_23, %110, %c0_24] : memref<2x8x128xi32, #tpu.memory_space<vmem>>, vector<1x1x128xi32>
    %112 = vector.shape_cast %111 : vector<1x1x128xi32> to vector<1x128xi32>
    %c1_25 = arith.constant 1 : index
    %113 = arith.index_cast %c6_i32 : i32 to index
    %c0_26 = arith.constant 0 : index
    %114 = vector.load %arg2[%c1_25, %113, %c0_26] : memref<2x8x128xi32, #tpu.memory_space<vmem>>, vector<1x1x128xi32>
    %115 = vector.shape_cast %114 : vector<1x1x128xi32> to vector<1x128xi32>
    %116 = vector.shape_cast %112 : vector<1x128xi32> to vector<1x128xi32>
    %117 = vector.broadcast %116 : vector<1x128xi32> to vector<96x128xi32>
    %118 = vector.shape_cast %115 : vector<1x128xi32> to vector<1x128xi32>
    %119 = vector.broadcast %118 : vector<1x128xi32> to vector<96x128xi32>
    %120 = arith.cmpi eq, %117, %0 : vector<96x128xi32>
    %121 = arith.extui %120 : vector<96x128xi1> to vector<96x128xi32>
    %122 = arith.cmpi eq, %119, %0 : vector<96x128xi32>
    %123 = arith.extui %122 : vector<96x128xi1> to vector<96x128xi32>
    %124 = arith.muli %121, %123 : vector<96x128xi32>
    %125 = arith.addi %107, %124 : vector<96x128xi32>
    %126 = arith.addi %121, %123 : vector<96x128xi32>
    %127 = arith.addi %109, %126 : vector<96x128xi32>
    %c7_i32 = arith.constant 7 : i32
    %c0_27 = arith.constant 0 : index
    %128 = arith.index_cast %c7_i32 : i32 to index
    %c0_28 = arith.constant 0 : index
    %129 = vector.load %arg2[%c0_27, %128, %c0_28] : memref<2x8x128xi32, #tpu.memory_space<vmem>>, vector<1x1x128xi32>
    %130 = vector.shape_cast %129 : vector<1x1x128xi32> to vector<1x128xi32>
    %c1_29 = arith.constant 1 : index
    %131 = arith.index_cast %c7_i32 : i32 to index
    %c0_30 = arith.constant 0 : index
    %132 = vector.load %arg2[%c1_29, %131, %c0_30] : memref<2x8x128xi32, #tpu.memory_space<vmem>>, vector<1x1x128xi32>
    %133 = vector.shape_cast %132 : vector<1x1x128xi32> to vector<1x128xi32>
    %134 = vector.shape_cast %130 : vector<1x128xi32> to vector<1x128xi32>
    %135 = vector.broadcast %134 : vector<1x128xi32> to vector<96x128xi32>
    %136 = vector.shape_cast %133 : vector<1x128xi32> to vector<1x128xi32>
    %137 = vector.broadcast %136 : vector<1x128xi32> to vector<96x128xi32>
    %138 = arith.cmpi eq, %135, %0 : vector<96x128xi32>
    %139 = arith.extui %138 : vector<96x128xi1> to vector<96x128xi32>
    %140 = arith.cmpi eq, %137, %0 : vector<96x128xi32>
    %141 = arith.extui %140 : vector<96x128xi1> to vector<96x128xi32>
    %142 = arith.muli %139, %141 : vector<96x128xi32>
    %143 = arith.addi %125, %142 : vector<96x128xi32>
    %144 = arith.addi %139, %141 : vector<96x128xi32>
    %145 = arith.addi %127, %144 : vector<96x128xi32>
    %c8_i32 = arith.constant 8 : i32
    %c0_i32_31 = arith.constant 0 : i32
    %146 = arith.cmpi eq, %arg1, %c0_i32_31 : i32
    %147 = arith.extui %146 : i1 to i32
    %c0_i32_32 = arith.constant 0 : i32
    %148 = arith.cmpi ne, %147, %c0_i32_32 : i32
    scf.if %148 {
      %c0_35 = arith.constant 0 : index
      %c0_36 = arith.constant 0 : index
      %152 = vector.load %arg3[%c0_35, %c0_36] : memref<96x128xi32, #tpu.memory_space<vmem>>, vector<96x128xi32>
      tpu.vector_store %arg3[%c0_35, %c0_36], %143 {strides = array<i32>} : memref<96x128xi32, #tpu.memory_space<vmem>>, vector<96x128xi32>,
      %c0_37 = arith.constant 0 : index
      %c0_38 = arith.constant 0 : index
      %153 = vector.load %arg4[%c0_37, %c0_38] : memref<96x128xi32, #tpu.memory_space<vmem>>, vector<96x128xi32>
      tpu.vector_store %arg4[%c0_37, %c0_38], %145 {strides = array<i32>} : memref<96x128xi32, #tpu.memory_space<vmem>>, vector<96x128xi32>,
    } else {
    }
    %c0_i32_33 = arith.constant 0 : i32
    %149 = arith.cmpi ne, %arg1, %c0_i32_33 : i32
    %150 = arith.extui %149 : i1 to i32
    %c0_i32_34 = arith.constant 0 : i32
    %151 = arith.cmpi ne, %150, %c0_i32_34 : i32
    scf.if %151 {
      %c0_35 = arith.constant 0 : index
      %c0_36 = arith.constant 0 : index
      %152 = vector.load %arg3[%c0_35, %c0_36] : memref<96x128xi32, #tpu.memory_space<vmem>>, vector<96x128xi32>
      %153 = arith.addi %152, %143 : vector<96x128xi32>
      %c0_37 = arith.constant 0 : index
      %c0_38 = arith.constant 0 : index
      %154 = vector.load %arg3[%c0_37, %c0_38] : memref<96x128xi32, #tpu.memory_space<vmem>>, vector<96x128xi32>
      tpu.vector_store %arg3[%c0_37, %c0_38], %153 {strides = array<i32>} : memref<96x128xi32, #tpu.memory_space<vmem>>, vector<96x128xi32>,
      %c0_39 = arith.constant 0 : index
      %c0_40 = arith.constant 0 : index
      %155 = vector.load %arg4[%c0_39, %c0_40] : memref<96x128xi32, #tpu.memory_space<vmem>>, vector<96x128xi32>
      %156 = arith.addi %155, %145 : vector<96x128xi32>
      %c0_41 = arith.constant 0 : index
      %c0_42 = arith.constant 0 : index
      %157 = vector.load %arg4[%c0_41, %c0_42] : memref<96x128xi32, #tpu.memory_space<vmem>>, vector<96x128xi32>
      tpu.vector_store %arg4[%c0_41, %c0_42], %156 {strides = array<i32>} : memref<96x128xi32, #tpu.memory_space<vmem>>, vector<96x128xi32>,
    } else {
    }
    return
  }
  func.func @transform_0(%arg0: i32, %arg1: i32) -> (i32, i32, i32) {
    %c1_i32 = arith.constant 1 : i32
    %0 = arith.muli %arg0, %c1_i32 : i32
    %1 = arith.addi %0, %arg1 : i32
    %c0_i32 = arith.constant 0 : i32
    %c0_i32_0 = arith.constant 0 : i32
    %c0_i32_1 = arith.constant 0 : i32
    return %c0_i32, %1, %c0_i32_0 : i32, i32, i32
  }
  func.func @transform_1(%arg0: i32, %arg1: i32) -> (i32, i32) {
    %c0_i32 = arith.constant 0 : i32
    %c0_i32_0 = arith.constant 0 : i32
    return %arg0, %c0_i32 : i32, i32
  }
  func.func @transform_2(%arg0: i32, %arg1: i32) -> (i32, i32) {
    %c0_i32 = arith.constant 0 : i32
    %c0_i32_0 = arith.constant 0 : i32
    return %arg0, %c0_i32 : i32, i32
  }
}

</mosaic_0001>

<llo_original>
// kernel: tpu_custom_call.1
$region0: #{tpu_custom_call.1}
  #allocation0 [shape = 'u32[]', space=smem, size = 0x4, offset = 0x4, fixed_abs, tag = 'smem constant byte address 0x4 - core index']
  #allocation1 [shape = 'u32[144,128]{1,0:T(1,128)}', space=vmem, size = 0x12000, scoped, tag = 'internal scratch']
  %s0 = inlined_call_operand.hbm [shape: s32[2,16,128], index: 0, kind: input, shape index: {}]
  %s1 = inlined_call_operand.hbm [shape: s32[192,128], index: 1, kind: output, shape index: {0}]
  %s2 = inlined_call_operand.hbm [shape: s32[192,128], index: 2, kind: output, shape index: {1}]
  %3 = xla_tuple %s1, %s2
  %s4 = sld [smem:[#allocation0]]
  $region57: #{tpu_custom_call.1} parent=0
    _
  %s6 = ssub.s32 1, %s4
  %s7 = scalar_select 0, %s6, %s4
  $region1: #{tpu_custom_call.1} parent=0
    #allocation2 [shape = 'u8[16384]{0}', space=vmem, size = 0x4000, scoped, tag = 'input window, operand 0']
    #allocation3 [shape = 's32[2]{0}', space=sflag, size = 0x8, scoped, tag = 'scoped memory for tpu_custom_call.1']
    #allocation4 [shape = 's32[2]{0}', space=sflag, size = 0x8, scoped, tag = 'scoped memory for tpu_custom_call.1']
    #allocation5 [shape = 'u8[98304]{0}', space=vmem, size = 0x18000, scoped, tag = 'output window, operand 0']
    #allocation6 [shape = 'u8[98304]{0}', space=vmem, size = 0x18000, scoped, tag = 'output window, operand 1']
    #allocation7 [shape = 's32[2]{0}', space=sflag, size = 0x8, scoped, tag = 'scoped memory for tpu_custom_call.1']
    %8 = vsyncpa [#allocation3], 0
    %s9 = scalar_lea.sflag [#allocation3], 1
    %10 = vsyncpa %s9, 0
    %11 = vsyncpa [#allocation4], 0
    %s12 = scalar_lea.sflag [#allocation4], 1
    %13 = vsyncpa %s12, 0
    %14 = vsyncpa [#allocation7], 0
    %s15 = scalar_lea.sflag [#allocation7], 1
    %16 = vsyncpa %s15, 0
    loop: start=0, step=1, limit=4
    $region2: #{tpu_custom_call.1} parent=1 // loop_pre_header
      _
    $region3: #{tpu_custom_call.1} parent=1 // loop_header
      %s18 = sphi 0, %s22
      %p19 = scmp.ge.s32.totalorder %s18, 4
      %s25 = sphi 0, %s37
      %s26 = sphi 0, %s33
      %s27 = sphi 0, %s25
      %s28 = sphi 0, %s26
      %s29 = sphi 0, %s27
      %s30 = sphi 0, %s28
      %s42 = sphi 0, %s44
      %s45 = sphi 0, %s42
      %s46 = sphi 0, %s45
      %s62 = sphi 0, %s46
      %s68 = sphi 0, %s70
      %s71 = sphi 0, %s68
      %s72 = sphi 0, %s71
      %s88 = sphi 0, %s72
      %s94 = sphi 0, %s96
      %s97 = sphi 0, %s94
      %s98 = sphi 0, %s97
      %s114 = sphi 0, %s98
    $region4: #{tpu_custom_call.1} parent=1 // loop_header_branch
      %21 = sbr.rel (%p19) target = $region8
    $region5: #{tpu_custom_call.1} parent=1 // loop_body
      %s23 = ssub.s32 %s18, 1
      %s24 = ssub.s32 %s18, 2
      %s31 = sadd.s32 1, %s26
      %p32 = scmp.ge.s32.totalorder %s31, 1
      %s33 = scalar_select %p32, 0, %s31
      %s34 = sadd.s32 1, %s25
      %s35 = scalar_select %p32, %s34, %s25
      %p36 = scmp.ge.s32.totalorder %s35, 2
      %s37 = scalar_select %p36, 0, %s35
      %s38 = sadd.s32 %s25, %s26
      %s39 = sadd.s32 %s37, %s33
      %s40 = ssub.s32 %s38, %s39
      %p41 = scmp.eq.s32.totalorder %s40, 0
      %s43 = sadd.s32 %s42, 1
      %s44 = scalar_select %p41, %s42, %s43
      %p47 = pneg %p41
      %p48 = scmp.eq.s32.totalorder %s18, 1
      %p49 = por %p47, %p48
      %p50 = scmp.ne.s32.totalorder %s42, %s45
      %p51 = scmp.eq.s32.totalorder %s18, 0
      %p52 = por %p50, %p51
      %p53 = scmp.ne.s32.totalorder %s42, %s45
      %p54 = scmp.eq.s32.totalorder %s23, 1
      %p55 = por %p53, %p54
      %p56 = scmp.ne.s32.totalorder %s45, %s46
      %p57 = scmp.eq.s32.totalorder %s23, 0
      %p58 = por %p56, %p57
      %p59 = scmp.ne.s32.totalorder %s45, %s46
      %p60 = scmp.eq.s32.totalorder %s24, 1
      %p61 = por %p59, %p60
      %p63 = scmp.ne.s32.totalorder %s46, %s62
      %p64 = scmp.eq.s32.totalorder %s24, 0
      %p65 = por %p63, %p64
      %s66 = ssub.s32 %s25, %s37
      %p67 = scmp.eq.s32.totalorder %s66, 0
      %s69 = sadd.s32 %s68, 1
      %s70 = scalar_select %p67, %s68, %s69
      %p73 = pneg %p67
      %p74 = scmp.eq.s32.totalorder %s18, 1
      %p75 = por %p73, %p74
      %p76 = scmp.ne.s32.totalorder %s68, %s71
      %p77 = scmp.eq.s32.totalorder %s18, 0
      %p78 = por %p76, %p77
      %p79 = scmp.ne.s32.totalorder %s68, %s71
      %p80 = scmp.eq.s32.totalorder %s23, 1
      %p81 = por %p79, %p80
      %p82 = scmp.ne.s32.totalorder %s71, %s72
      %p83 = scmp.eq.s32.totalorder %s23, 0
      %p84 = por %p82, %p83
      %p85 = scmp.ne.s32.totalorder %s71, %s72
      %p86 = scmp.eq.s32.totalorder %s24, 1
      %p87 = por %p85, %p86
      %p89 = scmp.ne.s32.totalorder %s72, %s88
      %p90 = scmp.eq.s32.totalorder %s24, 0
      %p91 = por %p89, %p90
      %s92 = ssub.s32 %s25, %s37
      %p93 = scmp.eq.s32.totalorder %s92, 0
      %s95 = sadd.s32 %s94, 1
      %s96 = scalar_select %p93, %s94, %s95
      %p99 = pneg %p93
      %p100 = scmp.eq.s32.totalorder %s18, 1
      %p101 = por %p99, %p100
      %p102 = scmp.ne.s32.totalorder %s94, %s97
      %p103 = scmp.eq.s32.totalorder %s18, 0
      %p104 = por %p102, %p103
      %p105 = scmp.ne.s32.totalorder %s94, %s97
      %p106 = scmp.eq.s32.totalorder %s23, 1
      %p107 = por %p105, %p106
      %p108 = scmp.ne.s32.totalorder %s97, %s98
      %p109 = scmp.eq.s32.totalorder %s23, 0
      %p110 = por %p108, %p109
      %p111 = scmp.ne.s32.totalorder %s97, %s98
      %p112 = scmp.eq.s32.totalorder %s24, 1
      %p113 = por %p111, %p112
      %p115 = scmp.ne.s32.totalorder %s98, %s114
      %p116 = scmp.eq.s32.totalorder %s24, 0
      %p117 = por %p115, %p116
      %p118 = scmp.le.s32.totalorder 1, %s18
      %p119 = scmp.lt.s32.totalorder %s18, 3
      %p120 = pnand %p118, %p119
      %p121 = pneg %p120
      // Predicated region
      $region9: #{tpu_custom_call.1} parent=5 // pred_check
        _
      $region10: #{tpu_custom_call.1} parent=5 // pred_check_branch
        %123 = sbr.rel (%p120) target = $region12
      $region11: #{tpu_custom_call.1} parent=5 // pred_region
        %s124 = ssub.s32 %s18, 1
      $region12: #{tpu_custom_call.1} parent=5 // pred_fallthru
        _
      %p125 = scmp.lt.s32.totalorder %s18, 2
      // Predicated region
      $region13: #{tpu_custom_call.1} parent=5 // pred_check
        %p126 = pneg %p125
      $region14: #{tpu_custom_call.1} parent=5 // pred_check_branch
        %128 = sbr.rel (%p126) target = $region16
      $region15: #{tpu_custom_call.1} parent=5 // pred_region
        // Predicated region
        $region17: #{tpu_custom_call.1} parent=15 // pred_check
          %p129 = pneg %p52
        $region18: #{tpu_custom_call.1} parent=15 // pred_check_branch
          %131 = sbr.rel (%p129) target = $region20
        $region19: #{tpu_custom_call.1} parent=15 // pred_region
          %s132 = sand.u32 %s42, 1
          %s133 = scalar_lea.sflag [#allocation3], %s132
          %s134 = sand.u32 %s42, 1
          %s135 = smul.addr %s134, 16
          %s136 = scalar_lea.vmem [#allocation2], %s135
          %s137 = sadd.s32 %s25, %s26
          %s139 = ssub.s32 256, 256
          %140 = vsyncadd %s133, %s139
          %s141 = smul.addr %s137, 128
          %s142 = scalar_lea.hbm %s0, %s141
          %s143 = sshll.u32 %s136, 4
          %s144 = int_to_ptr.vmem [resolvable:$true] %s143
          %149 = dma.hbm_to_vmem [thread:$0]  %s142, 256, %s144, %s133, 256, 128, 8
        $region20: #{tpu_custom_call.1} parent=15 // pred_fallthru
          _
      $region16: #{tpu_custom_call.1} parent=5 // pred_fallthru
        _
      %p150 = scmp.le.s32.totalorder 1, %s18
      %p151 = scmp.lt.s32.totalorder %s18, 3
      %p152 = pnand %p150, %p151
      %p153 = pneg %p152
      // Predicated region
      $region21: #{tpu_custom_call.1} parent=5 // pred_check
        _
      $region22: #{tpu_custom_call.1} parent=5 // pred_check_branch
        %155 = sbr.rel (%p152) target = $region24
      $region23: #{tpu_custom_call.1} parent=5 // pred_region
        %s156 = ssub.s32 %s18, 1
        %s157 = sand.u32 %s45, 1
        %s158 = scalar_lea.sflag [#allocation3], %s157
        %s159 = sand.u32 %s45, 1
        %s160 = smul.addr %s159, 16
        %s161 = scalar_lea.vmem [#allocation2], %s160
        // Predicated region
        $region25: #{tpu_custom_call.1} parent=23 // pred_check
          %p162 = pneg %p58
        $region26: #{tpu_custom_call.1} parent=23 // pred_check_branch
          %164 = sbr.rel (%p162) target = $region28
        $region27: #{tpu_custom_call.1} parent=23 // pred_region
          %165 = dma.done %s158, 256
        $region28: #{tpu_custom_call.1} parent=23 // pred_fallthru
          _
        %s166 = sand.u32 %s45, 1
        %s167 = scalar_lea.sflag [#allocation3], %s166
        %s168 = sand.u32 %s45, 1
        %s169 = smul.addr %s168, 16
        %s170 = scalar_lea.vmem [#allocation2], %s169
        %p171 = pneg %p58
        %p172 = pneg %p55
        %p173 = pneg %p84
        %p174 = pneg %p81
        %s175 = sand.u32 %s71, 1
        %s176 = scalar_lea.sflag [#allocation4], %s175
        %s177 = sand.u32 %s71, 1
        %s178 = smul.addr %s177, 96
        %s179 = scalar_lea.vmem [#allocation5], %s178
        %p180 = pneg %p110
        %p181 = pneg %p107
        %s182 = sand.u32 %s97, 1
        %s183 = scalar_lea.sflag [#allocation7], %s182
        %s184 = sand.u32 %s97, 1
        %s185 = smul.addr %s184, 96
        %s186 = scalar_lea.vmem [#allocation6], %s185
        %s187 = sadd.s32 %s27, %s28
        %s188 = smul.u32 12, %s27
        %s189 = smul.u32 12, %s27
        %v190 = vlaneseq
        %v191 = vshrl.u32 %v190, 7
        %v192 = vadd.s32 %v191, 8
        %v193 = vadd.s32 %v191, 16
        %v194 = vadd.s32 %v191, 24
        %v195 = vadd.s32 %v191, 32
        %v196 = vadd.s32 %v191, 40
        %v197 = vadd.s32 %v191, 48
        %v198 = vadd.s32 %v191, 56
        %v199 = vadd.s32 %v191, 64
        %v200 = vadd.s32 %v191, 72
        %v201 = vadd.s32 %v191, 80
        %v202 = vadd.s32 %v191, 88
        %v203 = vld [vmem:[%s161] sm:$0x1]
        %s204 = scalar_lea.vmem %s161, 8 [#allocation2]
        %v205 = vld [vmem:[%s204] sm:$0x1]
        %v206 = vlaneseq
        %v207 = vshrl.u32 %v206, 7
        %v208 = vsub.s32 0, %v207
        %v209 = vrot.slane %v203, %v208
        %v210 = vlaneseq
        %v211 = vshrl.u32 %v210, 7
        %v212 = vsub.s32 0, %v211
        %v213 = vrot.slane %v205, %v212
        %vm214 = vcmp.eq.s32.totalorder %v209, %v191
        %vm215 = vcmp.eq.s32.totalorder %v209, %v192
        %vm216 = vcmp.eq.s32.totalorder %v209, %v193
        %vm217 = vcmp.eq.s32.totalorder %v209, %v194
        %vm218 = vcmp.eq.s32.totalorder %v209, %v195
        %vm219 = vcmp.eq.s32.totalorder %v209, %v196
        %vm220 = vcmp.eq.s32.totalorder %v209, %v197
        %vm221 = vcmp.eq.s32.totalorder %v209, %v198
        %vm222 = vcmp.eq.s32.totalorder %v209, %v199
        %vm223 = vcmp.eq.s32.totalorder %v209, %v200
        %vm224 = vcmp.eq.s32.totalorder %v209, %v201
        %vm225 = vcmp.eq.s32.totalorder %v209, %v202
        %v226 = vsel %vm214, 1, 0
        %v227 = vsel %vm215, 1, 0
        %v228 = vsel %vm216, 1, 0
        %v229 = vsel %vm217, 1, 0
        %v230 = vsel %vm218, 1, 0
        %v231 = vsel %vm219, 1, 0
        %v232 = vsel %vm220, 1, 0
        %v233 = vsel %vm221, 1, 0
        %v234 = vsel %vm222, 1, 0
        %v235 = vsel %vm223, 1, 0
        %v236 = vsel %vm224, 1, 0
        %v237 = vsel %vm225, 1, 0
        %vm238 = vcmp.eq.s32.totalorder %v213, %v191
        %vm239 = vcmp.eq.s32.totalorder %v213, %v192
        %vm240 = vcmp.eq.s32.totalorder %v213, %v193
        %vm241 = vcmp.eq.s32.totalorder %v213, %v194
        %vm242 = vcmp.eq.s32.totalorder %v213, %v195
        %vm243 = vcmp.eq.s32.totalorder %v213, %v196
        %vm244 = vcmp.eq.s32.totalorder %v213, %v197
        %vm245 = vcmp.eq.s32.totalorder %v213, %v198
        %vm246 = vcmp.eq.s32.totalorder %v213, %v199
        %vm247 = vcmp.eq.s32.totalorder %v213, %v200
        %vm248 = vcmp.eq.s32.totalorder %v213, %v201
        %vm249 = vcmp.eq.s32.totalorder %v213, %v202
        %v250 = vsel %vm238, 1, 0
        %v251 = vsel %vm239, 1, 0
        %v252 = vsel %vm240, 1, 0
        %v253 = vsel %vm241, 1, 0
        %v254 = vsel %vm242, 1, 0
        %v255 = vsel %vm243, 1, 0
        %v256 = vsel %vm244, 1, 0
        %v257 = vsel %vm245, 1, 0
        %v258 = vsel %vm246, 1, 0
        %v259 = vsel %vm247, 1, 0
        %v260 = vsel %vm248, 1, 0
        %v261 = vsel %vm249, 1, 0
        %v262 = vmul.u32 %v226, %v250
        %v263 = vmul.u32 %v227, %v251
        %v264 = vmul.u32 %v228, %v252
        %v265 = vmul.u32 %v229, %v253
        %v266 = vmul.u32 %v230, %v254
        %v267 = vmul.u32 %v231, %v255
        %v268 = vmul.u32 %v232, %v256
        %v269 = vmul.u32 %v233, %v257
        %v270 = vmul.u32 %v234, %v258
        %v271 = vmul.u32 %v235, %v259
        %v272 = vmul.u32 %v236, %v260
        %v273 = vmul.u32 %v237, %v261
        %v274 = vadd.s32 %v226, %v250
        %v275 = vadd.s32 %v227, %v251
        %v276 = vadd.s32 %v228, %v252
        %v277 = vadd.s32 %v229, %v253
        %v278 = vadd.s32 %v230, %v254
        %v279 = vadd.s32 %v231, %v255
        %v280 = vadd.s32 %v232, %v256
        %v281 = vadd.s32 %v233, %v257
        %v282 = vadd.s32 %v234, %v258
        %v283 = vadd.s32 %v235, %v259
        %v284 = vadd.s32 %v236, %v260
        %v285 = vadd.s32 %v237, %v261
        %v286 = vld [vmem:[%s161 + $0x1] sm:$0x1]
        %v287 = vld [vmem:[%s204 + $0x1] sm:$0x1]
        %v288 = vlaneseq
        %v289 = vshrl.u32 %v288, 7
        %v290 = vsub.s32 0, %v289
        %v291 = vrot.slane %v286, %v290
        %v292 = vlaneseq
        %v293 = vshrl.u32 %v292, 7
        %v294 = vsub.s32 0, %v293
        %v295 = vrot.slane %v287, %v294
        %vm296 = vcmp.eq.s32.totalorder %v291, %v191
        %vm297 = vcmp.eq.s32.totalorder %v291, %v192
        %vm298 = vcmp.eq.s32.totalorder %v291, %v193
        %vm299 = vcmp.eq.s32.totalorder %v291, %v194
        %vm300 = vcmp.eq.s32.totalorder %v291, %v195
        %vm301 = vcmp.eq.s32.totalorder %v291, %v196
        %vm302 = vcmp.eq.s32.totalorder %v291, %v197
        %vm303 = vcmp.eq.s32.totalorder %v291, %v198
        %vm304 = vcmp.eq.s32.totalorder %v291, %v199
        %vm305 = vcmp.eq.s32.totalorder %v291, %v200
        %vm306 = vcmp.eq.s32.totalorder %v291, %v201
        %vm307 = vcmp.eq.s32.totalorder %v291, %v202
        %v308 = vsel %vm296, 1, 0
        %v309 = vsel %vm297, 1, 0
        %v310 = vsel %vm298, 1, 0
        %v311 = vsel %vm299, 1, 0
        %v312 = vsel %vm300, 1, 0
        %v313 = vsel %vm301, 1, 0
        %v314 = vsel %vm302, 1, 0
        %v315 = vsel %vm303, 1, 0
        %v316 = vsel %vm304, 1, 0
        %v317 = vsel %vm305, 1, 0
        %v318 = vsel %vm306, 1, 0
        %v319 = vsel %vm307, 1, 0
        %vm320 = vcmp.eq.s32.totalorder %v295, %v191
        %vm321 = vcmp.eq.s32.totalorder %v295, %v192
        %vm322 = vcmp.eq.s32.totalorder %v295, %v193
        %vm323 = vcmp.eq.s32.totalorder %v295, %v194
        %vm324 = vcmp.eq.s32.totalorder %v295, %v195
        %vm325 = vcmp.eq.s32.totalorder %v295, %v196
        %vm326 = vcmp.eq.s32.totalorder %v295, %v197
        %vm327 = vcmp.eq.s32.totalorder %v295, %v198
        %vm328 = vcmp.eq.s32.totalorder %v295, %v199
        %vm329 = vcmp.eq.s32.totalorder %v295, %v200
        %vm330 = vcmp.eq.s32.totalorder %v295, %v201
        %vm331 = vcmp.eq.s32.totalorder %v295, %v202
        %v332 = vsel %vm320, 1, 0
        %v333 = vsel %vm321, 1, 0
        %v334 = vsel %vm322, 1, 0
        %v335 = vsel %vm323, 1, 0
        %v336 = vsel %vm324, 1, 0
        %v337 = vsel %vm325, 1, 0
        %v338 = vsel %vm326, 1, 0
        %v339 = vsel %vm327, 1, 0
        %v340 = vsel %vm328, 1, 0
        %v341 = vsel %vm329, 1, 0
        %v342 = vsel %vm330, 1, 0
        %v343 = vsel %vm331, 1, 0
        %v344 = vmul.u32 %v308, %v332
        %v345 = vmul.u32 %v309, %v333
        %v346 = vmul.u32 %v310, %v334
        %v347 = vmul.u32 %v311, %v335
        %v348 = vmul.u32 %v312, %v336
        %v349 = vmul.u32 %v313, %v337
        %v350 = vmul.u32 %v314, %v338
        %v351 = vmul.u32 %v315, %v339
        %v352 = vmul.u32 %v316, %v340
        %v353 = vmul.u32 %v317, %v341
        %v354 = vmul.u32 %v318, %v342
        %v355 = vmul.u32 %v319, %v343
        %v356 = vadd.s32 %v262, %v344
        %v357 = vadd.s32 %v263, %v345
        %v358 = vadd.s32 %v264, %v346
        %v359 = vadd.s32 %v265, %v347
        %v360 = vadd.s32 %v266, %v348
        %v361 = vadd.s32 %v267, %v349
        %v362 = vadd.s32 %v268, %v350
        %v363 = vadd.s32 %v269, %v351
        %v364 = vadd.s32 %v270, %v352
        %v365 = vadd.s32 %v271, %v353
        %v366 = vadd.s32 %v272, %v354
        %v367 = vadd.s32 %v273, %v355
        %v368 = vadd.s32 %v308, %v332
        %v369 = vadd.s32 %v309, %v333
        %v370 = vadd.s32 %v310, %v334
        %v371 = vadd.s32 %v311, %v335
        %v372 = vadd.s32 %v312, %v336
        %v373 = vadd.s32 %v313, %v337
        %v374 = vadd.s32 %v314, %v338
        %v375 = vadd.s32 %v315, %v339
        %v376 = vadd.s32 %v316, %v340
        %v377 = vadd.s32 %v317, %v341
        %v378 = vadd.s32 %v318, %v342
        %v379 = vadd.s32 %v319, %v343
        %v380 = vadd.s32 %v274, %v368
        %v381 = vadd.s32 %v275, %v369
        %v382 = vadd.s32 %v276, %v370
        %v383 = vadd.s32 %v277, %v371
        %v384 = vadd.s32 %v278, %v372
        %v385 = vadd.s32 %v279, %v373
        %v386 = vadd.s32 %v280, %v374
        %v387 = vadd.s32 %v281, %v375
        %v388 = vadd.s32 %v282, %v376
        %v389 = vadd.s32 %v283, %v377
        %v390 = vadd.s32 %v284, %v378
        %v391 = vadd.s32 %v285, %v379
        %v392 = vld [vmem:[%s161 + $0x2] sm:$0x1]
        %v393 = vld [vmem:[%s204 + $0x2] sm:$0x1]
        %v394 = vlaneseq
        %v395 = vshrl.u32 %v394, 7
        %v396 = vsub.s32 0, %v395
        %v397 = vrot.slane %v392, %v396
        %v398 = vlaneseq
        %v399 = vshrl.u32 %v398, 7
        %v400 = vsub.s32 0, %v399
        %v401 = vrot.slane %v393, %v400
        %vm402 = vcmp.eq.s32.totalorder %v397, %v191
        %vm403 = vcmp.eq.s32.totalorder %v397, %v192
        %vm404 = vcmp.eq.s32.totalorder %v397, %v193
        %vm405 = vcmp.eq.s32.totalorder %v397, %v194
        %vm406 = vcmp.eq.s32.totalorder %v397, %v195
        %vm407 = vcmp.eq.s32.totalorder %v397, %v196
        %vm408 = vcmp.eq.s32.totalorder %v397, %v197
        %vm409 = vcmp.eq.s32.totalorder %v397, %v198
        %vm410 = vcmp.eq.s32.totalorder %v397, %v199
        %vm411 = vcmp.eq.s32.totalorder %v397, %v200
        %vm412 = vcmp.eq.s32.totalorder %v397, %v201
        %vm413 = vcmp.eq.s32.totalorder %v397, %v202
        %v414 = vsel %vm402, 1, 0
        %v415 = vsel %vm403, 1, 0
        %v416 = vsel %vm404, 1, 0
        %v417 = vsel %vm405, 1, 0
        %v418 = vsel %vm406, 1, 0
        %v419 = vsel %vm407, 1, 0
        %v420 = vsel %vm408, 1, 0
        %v421 = vsel %vm409, 1, 0
        %v422 = vsel %vm410, 1, 0
        %v423 = vsel %vm411, 1, 0
        %v424 = vsel %vm412, 1, 0
        %v425 = vsel %vm413, 1, 0
        %vm426 = vcmp.eq.s32.totalorder %v401, %v191
        %vm427 = vcmp.eq.s32.totalorder %v401, %v192
        %vm428 = vcmp.eq.s32.totalorder %v401, %v193
        %vm429 = vcmp.eq.s32.totalorder %v401, %v194
        %vm430 = vcmp.eq.s32.totalorder %v401, %v195
        %vm431 = vcmp.eq.s32.totalorder %v401, %v196
        %vm432 = vcmp.eq.s32.totalorder %v401, %v197
        %vm433 = vcmp.eq.s32.totalorder %v401, %v198
        %vm434 = vcmp.eq.s32.totalorder %v401, %v199
        %vm435 = vcmp.eq.s32.totalorder %v401, %v200
        %vm436 = vcmp.eq.s32.totalorder %v401, %v201
        %vm437 = vcmp.eq.s32.totalorder %v401, %v202
        %v438 = vsel %vm426, 1, 0
        %v439 = vsel %vm427, 1, 0
        %v440 = vsel %vm428, 1, 0
        %v441 = vsel %vm429, 1, 0
        %v442 = vsel %vm430, 1, 0
        %v443 = vsel %vm431, 1, 0
        %v444 = vsel %vm432, 1, 0
        %v445 = vsel %vm433, 1, 0
        %v446 = vsel %vm434, 1, 0
        %v447 = vsel %vm435, 1, 0
        %v448 = vsel %vm436, 1, 0
        %v449 = vsel %vm437, 1, 0
        %v450 = vmul.u32 %v414, %v438
        %v451 = vmul.u32 %v415, %v439
        %v452 = vmul.u32 %v416, %v440
        %v453 = vmul.u32 %v417, %v441
        %v454 = vmul.u32 %v418, %v442
        %v455 = vmul.u32 %v419, %v443
        %v456 = vmul.u32 %v420, %v444
        %v457 = vmul.u32 %v421, %v445
        %v458 = vmul.u32 %v422, %v446
        %v459 = vmul.u32 %v423, %v447
        %v460 = vmul.u32 %v424, %v448
        %v461 = vmul.u32 %v425, %v449
        %v462 = vadd.s32 %v356, %v450
        %v463 = vadd.s32 %v357, %v451
        %v464 = vadd.s32 %v358, %v452
        %v465 = vadd.s32 %v359, %v453
        %v466 = vadd.s32 %v360, %v454
        %v467 = vadd.s32 %v361, %v455
        %v468 = vadd.s32 %v362, %v456
        %v469 = vadd.s32 %v363, %v457
        %v470 = vadd.s32 %v364, %v458
        %v471 = vadd.s32 %v365, %v459
        %v472 = vadd.s32 %v366, %v460
        %v473 = vadd.s32 %v367, %v461
        %v474 = vadd.s32 %v414, %v438
        %v475 = vadd.s32 %v415, %v439
        %v476 = vadd.s32 %v416, %v440
        %v477 = vadd.s32 %v417, %v441
        %v478 = vadd.s32 %v418, %v442
        %v479 = vadd.s32 %v419, %v443
        %v480 = vadd.s32 %v420, %v444
        %v481 = vadd.s32 %v421, %v445
        %v482 = vadd.s32 %v422, %v446
        %v483 = vadd.s32 %v423, %v447
        %v484 = vadd.s32 %v424, %v448
        %v485 = vadd.s32 %v425, %v449
        %v486 = vadd.s32 %v380, %v474
        %v487 = vadd.s32 %v381, %v475
        %v488 = vadd.s32 %v382, %v476
        %v489 = vadd.s32 %v383, %v477
        %v490 = vadd.s32 %v384, %v478
        %v491 = vadd.s32 %v385, %v479
        %v492 = vadd.s32 %v386, %v480
        %v493 = vadd.s32 %v387, %v481
        %v494 = vadd.s32 %v388, %v482
        %v495 = vadd.s32 %v389, %v483
        %v496 = vadd.s32 %v390, %v484
        %v497 = vadd.s32 %v391, %v485
        %v498 = vld [vmem:[%s161 + $0x3] sm:$0x1]
        %v499 = vld [vmem:[%s204 + $0x3] sm:$0x1]
        %v500 = vlaneseq
        %v501 = vshrl.u32 %v500, 7
        %v502 = vsub.s32 0, %v501
        %v503 = vrot.slane %v498, %v502
        %v504 = vlaneseq
        %v505 = vshrl.u32 %v504, 7
        %v506 = vsub.s32 0, %v505
        %v507 = vrot.slane %v499, %v506
        %vm508 = vcmp.eq.s32.totalorder %v503, %v191
        %vm509 = vcmp.eq.s32.totalorder %v503, %v192
        %vm510 = vcmp.eq.s32.totalorder %v503, %v193
        %vm511 = vcmp.eq.s32.totalorder %v503, %v194
        %vm512 = vcmp.eq.s32.totalorder %v503, %v195
        %vm513 = vcmp.eq.s32.totalorder %v503, %v196
        %vm514 = vcmp.eq.s32.totalorder %v503, %v197
        %vm515 = vcmp.eq.s32.totalorder %v503, %v198
        %vm516 = vcmp.eq.s32.totalorder %v503, %v199
        %vm517 = vcmp.eq.s32.totalorder %v503, %v200
        %vm518 = vcmp.eq.s32.totalorder %v503, %v201
        %vm519 = vcmp.eq.s32.totalorder %v503, %v202
        %v520 = vsel %vm508, 1, 0
        %v521 = vsel %vm509, 1, 0
        %v522 = vsel %vm510, 1, 0
        %v523 = vsel %vm511, 1, 0
        %v524 = vsel %vm512, 1, 0
        %v525 = vsel %vm513, 1, 0
        %v526 = vsel %vm514, 1, 0
        %v527 = vsel %vm515, 1, 0
        %v528 = vsel %vm516, 1, 0
        %v529 = vsel %vm517, 1, 0
        %v530 = vsel %vm518, 1, 0
        %v531 = vsel %vm519, 1, 0
        %vm532 = vcmp.eq.s32.totalorder %v507, %v191
        %vm533 = vcmp.eq.s32.totalorder %v507, %v192
        %vm534 = vcmp.eq.s32.totalorder %v507, %v193
        %vm535 = vcmp.eq.s32.totalorder %v507, %v194
        %vm536 = vcmp.eq.s32.totalorder %v507, %v195
        %vm537 = vcmp.eq.s32.totalorder %v507, %v196
        %vm538 = vcmp.eq.s32.totalorder %v507, %v197
        %vm539 = vcmp.eq.s32.totalorder %v507, %v198
        %vm540 = vcmp.eq.s32.totalorder %v507, %v199
        %vm541 = vcmp.eq.s32.totalorder %v507, %v200
        %vm542 = vcmp.eq.s32.totalorder %v507, %v201
        %vm543 = vcmp.eq.s32.totalorder %v507, %v202
        %v544 = vsel %vm532, 1, 0
        %v545 = vsel %vm533, 1, 0
        %v546 = vsel %vm534, 1, 0
        %v547 = vsel %vm535, 1, 0
        %v548 = vsel %vm536, 1, 0
        %v549 = vsel %vm537, 1, 0
        %v550 = vsel %vm538, 1, 0
        %v551 = vsel %vm539, 1, 0
        %v552 = vsel %vm540, 1, 0
        %v553 = vsel %vm541, 1, 0
        %v554 = vsel %vm542, 1, 0
        %v555 = vsel %vm543, 1, 0
        %v556 = vmul.u32 %v520, %v544
        %v557 = vmul.u32 %v521, %v545
        %v558 = vmul.u32 %v522, %v546
        %v559 = vmul.u32 %v523, %v547
        %v560 = vmul.u32 %v524, %v548
        %v561 = vmul.u32 %v525, %v549
        %v562 = vmul.u32 %v526, %v550
        %v563 = vmul.u32 %v527, %v551
        %v564 = vmul.u32 %v528, %v552
        %v565 = vmul.u32 %v529, %v553
        %v566 = vmul.u32 %v530, %v554
        %v567 = vmul.u32 %v531, %v555
        %v568 = vadd.s32 %v462, %v556
        %v569 = vadd.s32 %v463, %v557
        %v570 = vadd.s32 %v464, %v558
        %v571 = vadd.s32 %v465, %v559
        %v572 = vadd.s32 %v466, %v560
        %v573 = vadd.s32 %v467, %v561
        %v574 = vadd.s32 %v468, %v562
        %v575 = vadd.s32 %v469, %v563
        %v576 = vadd.s32 %v470, %v564
        %v577 = vadd.s32 %v471, %v565
        %v578 = vadd.s32 %v472, %v566
        %v579 = vadd.s32 %v473, %v567
        %v580 = vadd.s32 %v520, %v544
        %v581 = vadd.s32 %v521, %v545
        %v582 = vadd.s32 %v522, %v546
        %v583 = vadd.s32 %v523, %v547
        %v584 = vadd.s32 %v524, %v548
        %v585 = vadd.s32 %v525, %v549
        %v586 = vadd.s32 %v526, %v550
        %v587 = vadd.s32 %v527, %v551
        %v588 = vadd.s32 %v528, %v552
        %v589 = vadd.s32 %v529, %v553
        %v590 = vadd.s32 %v530, %v554
        %v591 = vadd.s32 %v531, %v555
        %v592 = vadd.s32 %v486, %v580
        %v593 = vadd.s32 %v487, %v581
        %v594 = vadd.s32 %v488, %v582
        %v595 = vadd.s32 %v489, %v583
        %v596 = vadd.s32 %v490, %v584
        %v597 = vadd.s32 %v491, %v585
        %v598 = vadd.s32 %v492, %v586
        %v599 = vadd.s32 %v493, %v587
        %v600 = vadd.s32 %v494, %v588
        %v601 = vadd.s32 %v495, %v589
        %v602 = vadd.s32 %v496, %v590
        %v603 = vadd.s32 %v497, %v591
        %v604 = vld [vmem:[%s161 + $0x4] sm:$0x1]
        %v605 = vld [vmem:[%s204 + $0x4] sm:$0x1]
        %v606 = vlaneseq
        %v607 = vshrl.u32 %v606, 7
        %v608 = vsub.s32 0, %v607
        %v609 = vrot.slane %v604, %v608
        %v610 = vlaneseq
        %v611 = vshrl.u32 %v610, 7
        %v612 = vsub.s32 0, %v611
        %v613 = vrot.slane %v605, %v612
        %vm614 = vcmp.eq.s32.totalorder %v609, %v191
        %vm615 = vcmp.eq.s32.totalorder %v609, %v192
        %vm616 = vcmp.eq.s32.totalorder %v609, %v193
        %vm617 = vcmp.eq.s32.totalorder %v609, %v194
        %vm618 = vcmp.eq.s32.totalorder %v609, %v195
        %vm619 = vcmp.eq.s32.totalorder %v609, %v196
        %vm620 = vcmp.eq.s32.totalorder %v609, %v197
        %vm621 = vcmp.eq.s32.totalorder %v609, %v198
        %vm622 = vcmp.eq.s32.totalorder %v609, %v199
        %vm623 = vcmp.eq.s32.totalorder %v609, %v200
        %vm624 = vcmp.eq.s32.totalorder %v609, %v201
        %vm625 = vcmp.eq.s32.totalorder %v609, %v202
        %v626 = vsel %vm614, 1, 0
        %v627 = vsel %vm615, 1, 0
        %v628 = vsel %vm616, 1, 0
        %v629 = vsel %vm617, 1, 0
        %v630 = vsel %vm618, 1, 0
        %v631 = vsel %vm619, 1, 0
        %v632 = vsel %vm620, 1, 0
        %v633 = vsel %vm621, 1, 0
        %v634 = vsel %vm622, 1, 0
        %v635 = vsel %vm623, 1, 0
        %v636 = vsel %vm624, 1, 0
        %v637 = vsel %vm625, 1, 0
        %vm638 = vcmp.eq.s32.totalorder %v613, %v191
        %vm639 = vcmp.eq.s32.totalorder %v613, %v192
        %vm640 = vcmp.eq.s32.totalorder %v613, %v193
        %vm641 = vcmp.eq.s32.totalorder %v613, %v194
        %vm642 = vcmp.eq.s32.totalorder %v613, %v195
        %vm643 = vcmp.eq.s32.totalorder %v613, %v196
        %vm644 = vcmp.eq.s32.totalorder %v613, %v197
        %vm645 = vcmp.eq.s32.totalorder %v613, %v198
        %vm646 = vcmp.eq.s32.totalorder %v613, %v199
        %vm647 = vcmp.eq.s32.totalorder %v613, %v200
        %vm648 = vcmp.eq.s32.totalorder %v613, %v201
        %vm649 = vcmp.eq.s32.totalorder %v613, %v202
        %v650 = vsel %vm638, 1, 0
        %v651 = vsel %vm639, 1, 0
        %v652 = vsel %vm640, 1, 0
        %v653 = vsel %vm641, 1, 0
        %v654 = vsel %vm642, 1, 0
        %v655 = vsel %vm643, 1, 0
        %v656 = vsel %vm644, 1, 0
        %v657 = vsel %vm645, 1, 0
        %v658 = vsel %vm646, 1, 0
        %v659 = vsel %vm647, 1, 0
        %v660 = vsel %vm648, 1, 0
        %v661 = vsel %vm649, 1, 0
        %v662 = vmul.u32 %v626, %v650
        %v663 = vmul.u32 %v627, %v651
        %v664 = vmul.u32 %v628, %v652
        %v665 = vmul.u32 %v629, %v653
        %v666 = vmul.u32 %v630, %v654
        %v667 = vmul.u32 %v631, %v655
        %v668 = vmul.u32 %v632, %v656
        %v669 = vmul.u32 %v633, %v657
        %v670 = vmul.u32 %v634, %v658
        %v671 = vmul.u32 %v635, %v659
        %v672 = vmul.u32 %v636, %v660
        %v673 = vmul.u32 %v637, %v661
        %v674 = vadd.s32 %v568, %v662
        %v675 = vadd.s32 %v569, %v663
        %v676 = vadd.s32 %v570, %v664
        %v677 = vadd.s32 %v571, %v665
        %v678 = vadd.s32 %v572, %v666
        %v679 = vadd.s32 %v573, %v667
        %v680 = vadd.s32 %v574, %v668
        %v681 = vadd.s32 %v575, %v669
        %v682 = vadd.s32 %v576, %v670
        %v683 = vadd.s32 %v577, %v671
        %v684 = vadd.s32 %v578, %v672
        %v685 = vadd.s32 %v579, %v673
        %v686 = vadd.s32 %v626, %v650
        %v687 = vadd.s32 %v627, %v651
        %v688 = vadd.s32 %v628, %v652
        %v689 = vadd.s32 %v629, %v653
        %v690 = vadd.s32 %v630, %v654
        %v691 = vadd.s32 %v631, %v655
        %v692 = vadd.s32 %v632, %v656
        %v693 = vadd.s32 %v633, %v657
        %v694 = vadd.s32 %v634, %v658
        %v695 = vadd.s32 %v635, %v659
        %v696 = vadd.s32 %v636, %v660
        %v697 = vadd.s32 %v637, %v661
        %v698 = vadd.s32 %v592, %v686
        %v699 = vadd.s32 %v593, %v687
        %v700 = vadd.s32 %v594, %v688
        %v701 = vadd.s32 %v595, %v689
        %v702 = vadd.s32 %v596, %v690
        %v703 = vadd.s32 %v597, %v691
        %v704 = vadd.s32 %v598, %v692
        %v705 = vadd.s32 %v599, %v693
        %v706 = vadd.s32 %v600, %v694
        %v707 = vadd.s32 %v601, %v695
        %v708 = vadd.s32 %v602, %v696
        %v709 = vadd.s32 %v603, %v697
        %v710 = vld [vmem:[%s161 + $0x5] sm:$0x1]
        %v711 = vld [vmem:[%s204 + $0x5] sm:$0x1]
        %v712 = vlaneseq
        %v713 = vshrl.u32 %v712, 7
        %v714 = vsub.s32 0, %v713
        %v715 = vrot.slane %v710, %v714
        %v716 = vlaneseq
        %v717 = vshrl.u32 %v716, 7
        %v718 = vsub.s32 0, %v717
        %v719 = vrot.slane %v711, %v718
        %vm720 = vcmp.eq.s32.totalorder %v715, %v191
        %vm721 = vcmp.eq.s32.totalorder %v715, %v192
        %vm722 = vcmp.eq.s32.totalorder %v715, %v193
        %vm723 = vcmp.eq.s32.totalorder %v715, %v194
        %vm724 = vcmp.eq.s32.totalorder %v715, %v195
        %vm725 = vcmp.eq.s32.totalorder %v715, %v196
        %vm726 = vcmp.eq.s32.totalorder %v715, %v197
        %vm727 = vcmp.eq.s32.totalorder %v715, %v198
        %vm728 = vcmp.eq.s32.totalorder %v715, %v199
        %vm729 = vcmp.eq.s32.totalorder %v715, %v200
        %vm730 = vcmp.eq.s32.totalorder %v715, %v201
        %vm731 = vcmp.eq.s32.totalorder %v715, %v202
        %v732 = vsel %vm720, 1, 0
        %v733 = vsel %vm721, 1, 0
        %v734 = vsel %vm722, 1, 0
        %v735 = vsel %vm723, 1, 0
        %v736 = vsel %vm724, 1, 0
        %v737 = vsel %vm725, 1, 0
        %v738 = vsel %vm726, 1, 0
        %v739 = vsel %vm727, 1, 0
        %v740 = vsel %vm728, 1, 0
        %v741 = vsel %vm729, 1, 0
        %v742 = vsel %vm730, 1, 0
        %v743 = vsel %vm731, 1, 0
        %vm744 = vcmp.eq.s32.totalorder %v719, %v191
        %vm745 = vcmp.eq.s32.totalorder %v719, %v192
        %vm746 = vcmp.eq.s32.totalorder %v719, %v193
        %vm747 = vcmp.eq.s32.totalorder %v719, %v194
        %vm748 = vcmp.eq.s32.totalorder %v719, %v195
        %vm749 = vcmp.eq.s32.totalorder %v719, %v196
        %vm750 = vcmp.eq.s32.totalorder %v719, %v197
        %vm751 = vcmp.eq.s32.totalorder %v719, %v198
        %vm752 = vcmp.eq.s32.totalorder %v719, %v199
        %vm753 = vcmp.eq.s32.totalorder %v719, %v200
        %vm754 = vcmp.eq.s32.totalorder %v719, %v201
        %vm755 = vcmp.eq.s32.totalorder %v719, %v202
        %v756 = vsel %vm744, 1, 0
        %v757 = vsel %vm745, 1, 0
        %v758 = vsel %vm746, 1, 0
        %v759 = vsel %vm747, 1, 0
        %v760 = vsel %vm748, 1, 0
        %v761 = vsel %vm749, 1, 0
        %v762 = vsel %vm750, 1, 0
        %v763 = vsel %vm751, 1, 0
        %v764 = vsel %vm752, 1, 0
        %v765 = vsel %vm753, 1, 0
        %v766 = vsel %vm754, 1, 0
        %v767 = vsel %vm755, 1, 0
        %v768 = vmul.u32 %v732, %v756
        %v769 = vmul.u32 %v733, %v757
        %v770 = vmul.u32 %v734, %v758
        %v771 = vmul.u32 %v735, %v759
        %v772 = vmul.u32 %v736, %v760
        %v773 = vmul.u32 %v737, %v761
        %v774 = vmul.u32 %v738, %v762
        %v775 = vmul.u32 %v739, %v763
        %v776 = vmul.u32 %v740, %v764
        %v777 = vmul.u32 %v741, %v765
        %v778 = vmul.u32 %v742, %v766
        %v779 = vmul.u32 %v743, %v767
        %v780 = vadd.s32 %v674, %v768
        %v781 = vadd.s32 %v675, %v769
        %v782 = vadd.s32 %v676, %v770
        %v783 = vadd.s32 %v677, %v771
        %v784 = vadd.s32 %v678, %v772
        %v785 = vadd.s32 %v679, %v773
        %v786 = vadd.s32 %v680, %v774
        %v787 = vadd.s32 %v681, %v775
        %v788 = vadd.s32 %v682, %v776
        %v789 = vadd.s32 %v683, %v777
        %v790 = vadd.s32 %v684, %v778
        %v791 = vadd.s32 %v685, %v779
        %v792 = vadd.s32 %v732, %v756
        %v793 = vadd.s32 %v733, %v757
        %v794 = vadd.s32 %v734, %v758
        %v795 = vadd.s32 %v735, %v759
        %v796 = vadd.s32 %v736, %v760
        %v797 = vadd.s32 %v737, %v761
        %v798 = vadd.s32 %v738, %v762
        %v799 = vadd.s32 %v739, %v763
        %v800 = vadd.s32 %v740, %v764
        %v801 = vadd.s32 %v741, %v765
        %v802 = vadd.s32 %v742, %v766
        %v803 = vadd.s32 %v743, %v767
        %v804 = vadd.s32 %v698, %v792
        %v805 = vadd.s32 %v699, %v793
        %v806 = vadd.s32 %v700, %v794
        %v807 = vadd.s32 %v701, %v795
        %v808 = vadd.s32 %v702, %v796
        %v809 = vadd.s32 %v703, %v797
        %v810 = vadd.s32 %v704, %v798
        %v811 = vadd.s32 %v705, %v799
        %v812 = vadd.s32 %v706, %v800
        %v813 = vadd.s32 %v707, %v801
        %v814 = vadd.s32 %v708, %v802
        %v815 = vadd.s32 %v709, %v803
        %v816 = vld [vmem:[%s161 + $0x6] sm:$0x1]
        %v817 = vld [vmem:[%s204 + $0x6] sm:$0x1]
        %v818 = vlaneseq
        %v819 = vshrl.u32 %v818, 7
        %v820 = vsub.s32 0, %v819
        %v821 = vrot.slane %v816, %v820
        %v822 = vlaneseq
        %v823 = vshrl.u32 %v822, 7
        %v824 = vsub.s32 0, %v823
        %v825 = vrot.slane %v817, %v824
        %vm826 = vcmp.eq.s32.totalorder %v821, %v191
        %vm827 = vcmp.eq.s32.totalorder %v821, %v192
        %vm828 = vcmp.eq.s32.totalorder %v821, %v193
        %vm829 = vcmp.eq.s32.totalorder %v821, %v194
        %vm830 = vcmp.eq.s32.totalorder %v821, %v195
        %vm831 = vcmp.eq.s32.totalorder %v821, %v196
        %vm832 = vcmp.eq.s32.totalorder %v821, %v197
        %vm833 = vcmp.eq.s32.totalorder %v821, %v198
        %vm834 = vcmp.eq.s32.totalorder %v821, %v199
        %vm835 = vcmp.eq.s32.totalorder %v821, %v200
        %vm836 = vcmp.eq.s32.totalorder %v821, %v201
        %vm837 = vcmp.eq.s32.totalorder %v821, %v202
        %v838 = vsel %vm826, 1, 0
        %v839 = vsel %vm827, 1, 0
        %v840 = vsel %vm828, 1, 0
        %v841 = vsel %vm829, 1, 0
        %v842 = vsel %vm830, 1, 0
        %v843 = vsel %vm831, 1, 0
        %v844 = vsel %vm832, 1, 0
        %v845 = vsel %vm833, 1, 0
        %v846 = vsel %vm834, 1, 0
        %v847 = vsel %vm835, 1, 0
        %v848 = vsel %vm836, 1, 0
        %v849 = vsel %vm837, 1, 0
        %vm850 = vcmp.eq.s32.totalorder %v825, %v191
        %vm851 = vcmp.eq.s32.totalorder %v825, %v192
        %vm852 = vcmp.eq.s32.totalorder %v825, %v193
        %vm853 = vcmp.eq.s32.totalorder %v825, %v194
        %vm854 = vcmp.eq.s32.totalorder %v825, %v195
        %vm855 = vcmp.eq.s32.totalorder %v825, %v196
        %vm856 = vcmp.eq.s32.totalorder %v825, %v197
        %vm857 = vcmp.eq.s32.totalorder %v825, %v198
        %vm858 = vcmp.eq.s32.totalorder %v825, %v199
        %vm859 = vcmp.eq.s32.totalorder %v825, %v200
        %vm860 = vcmp.eq.s32.totalorder %v825, %v201
        %vm861 = vcmp.eq.s32.totalorder %v825, %v202
        %v862 = vsel %vm850, 1, 0
        %v863 = vsel %vm851, 1, 0
        %v864 = vsel %vm852, 1, 0
        %v865 = vsel %vm853, 1, 0
        %v866 = vsel %vm854, 1, 0
        %v867 = vsel %vm855, 1, 0
        %v868 = vsel %vm856, 1, 0
        %v869 = vsel %vm857, 1, 0
        %v870 = vsel %vm858, 1, 0
        %v871 = vsel %vm859, 1, 0
        %v872 = vsel %vm860, 1, 0
        %v873 = vsel %vm861, 1, 0
        %v874 = vmul.u32 %v838, %v862
        %v875 = vmul.u32 %v839, %v863
        %v876 = vmul.u32 %v840, %v864
        %v877 = vmul.u32 %v841, %v865
        %v878 = vmul.u32 %v842, %v866
        %v879 = vmul.u32 %v843, %v867
        %v880 = vmul.u32 %v844, %v868
        %v881 = vmul.u32 %v845, %v869
        %v882 = vmul.u32 %v846, %v870
        %v883 = vmul.u32 %v847, %v871
        %v884 = vmul.u32 %v848, %v872
        %v885 = vmul.u32 %v849, %v873
        %v886 = vadd.s32 %v780, %v874
        %v887 = vadd.s32 %v781, %v875
        %v888 = vadd.s32 %v782, %v876
        %v889 = vadd.s32 %v783, %v877
        %v890 = vadd.s32 %v784, %v878
        %v891 = vadd.s32 %v785, %v879
        %v892 = vadd.s32 %v786, %v880
        %v893 = vadd.s32 %v787, %v881
        %v894 = vadd.s32 %v788, %v882
        %v895 = vadd.s32 %v789, %v883
        %v896 = vadd.s32 %v790, %v884
        %v897 = vadd.s32 %v791, %v885
        %v898 = vadd.s32 %v838, %v862
        %v899 = vadd.s32 %v839, %v863
        %v900 = vadd.s32 %v840, %v864
        %v901 = vadd.s32 %v841, %v865
        %v902 = vadd.s32 %v842, %v866
        %v903 = vadd.s32 %v843, %v867
        %v904 = vadd.s32 %v844, %v868
        %v905 = vadd.s32 %v845, %v869
        %v906 = vadd.s32 %v846, %v870
        %v907 = vadd.s32 %v847, %v871
        %v908 = vadd.s32 %v848, %v872
        %v909 = vadd.s32 %v849, %v873
        %v910 = vadd.s32 %v804, %v898
        %v911 = vadd.s32 %v805, %v899
        %v912 = vadd.s32 %v806, %v900
        %v913 = vadd.s32 %v807, %v901
        %v914 = vadd.s32 %v808, %v902
        %v915 = vadd.s32 %v809, %v903
        %v916 = vadd.s32 %v810, %v904
        %v917 = vadd.s32 %v811, %v905
        %v918 = vadd.s32 %v812, %v906
        %v919 = vadd.s32 %v813, %v907
        %v920 = vadd.s32 %v814, %v908
        %v921 = vadd.s32 %v815, %v909
        %v922 = vld [vmem:[%s161 + $0x7] sm:$0x1]
        %v923 = vld [vmem:[%s204 + $0x7] sm:$0x1]
        %v924 = vlaneseq
        %v925 = vshrl.u32 %v924, 7
        %v926 = vsub.s32 0, %v925
        %v927 = vrot.slane %v922, %v926
        %v928 = vlaneseq
        %v929 = vshrl.u32 %v928, 7
        %v930 = vsub.s32 0, %v929
        %v931 = vrot.slane %v923, %v930
        %vm932 = vcmp.eq.s32.totalorder %v927, %v191
        %vm933 = vcmp.eq.s32.totalorder %v927, %v192
        %vm934 = vcmp.eq.s32.totalorder %v927, %v193
        %vm935 = vcmp.eq.s32.totalorder %v927, %v194
        %vm936 = vcmp.eq.s32.totalorder %v927, %v195
        %vm937 = vcmp.eq.s32.totalorder %v927, %v196
        %vm938 = vcmp.eq.s32.totalorder %v927, %v197
        %vm939 = vcmp.eq.s32.totalorder %v927, %v198
        %vm940 = vcmp.eq.s32.totalorder %v927, %v199
        %vm941 = vcmp.eq.s32.totalorder %v927, %v200
        %vm942 = vcmp.eq.s32.totalorder %v927, %v201
        %vm943 = vcmp.eq.s32.totalorder %v927, %v202
        %v944 = vsel %vm932, 1, 0
        %v945 = vsel %vm933, 1, 0
        %v946 = vsel %vm934, 1, 0
        %v947 = vsel %vm935, 1, 0
        %v948 = vsel %vm936, 1, 0
        %v949 = vsel %vm937, 1, 0
        %v950 = vsel %vm938, 1, 0
        %v951 = vsel %vm939, 1, 0
        %v952 = vsel %vm940, 1, 0
        %v953 = vsel %vm941, 1, 0
        %v954 = vsel %vm942, 1, 0
        %v955 = vsel %vm943, 1, 0
        %vm956 = vcmp.eq.s32.totalorder %v931, %v191
        %vm957 = vcmp.eq.s32.totalorder %v931, %v192
        %vm958 = vcmp.eq.s32.totalorder %v931, %v193
        %vm959 = vcmp.eq.s32.totalorder %v931, %v194
        %vm960 = vcmp.eq.s32.totalorder %v931, %v195
        %vm961 = vcmp.eq.s32.totalorder %v931, %v196
        %vm962 = vcmp.eq.s32.totalorder %v931, %v197
        %vm963 = vcmp.eq.s32.totalorder %v931, %v198
        %vm964 = vcmp.eq.s32.totalorder %v931, %v199
        %vm965 = vcmp.eq.s32.totalorder %v931, %v200
        %vm966 = vcmp.eq.s32.totalorder %v931, %v201
        %vm967 = vcmp.eq.s32.totalorder %v931, %v202
        %v968 = vsel %vm956, 1, 0
        %v969 = vsel %vm957, 1, 0
        %v970 = vsel %vm958, 1, 0
        %v971 = vsel %vm959, 1, 0
        %v972 = vsel %vm960, 1, 0
        %v973 = vsel %vm961, 1, 0
        %v974 = vsel %vm962, 1, 0
        %v975 = vsel %vm963, 1, 0
        %v976 = vsel %vm964, 1, 0
        %v977 = vsel %vm965, 1, 0
        %v978 = vsel %vm966, 1, 0
        %v979 = vsel %vm967, 1, 0
        %v980 = vmul.u32 %v944, %v968
        %v981 = vmul.u32 %v945, %v969
        %v982 = vmul.u32 %v946, %v970
        %v983 = vmul.u32 %v947, %v971
        %v984 = vmul.u32 %v948, %v972
        %v985 = vmul.u32 %v949, %v973
        %v986 = vmul.u32 %v950, %v974
        %v987 = vmul.u32 %v951, %v975
        %v988 = vmul.u32 %v952, %v976
        %v989 = vmul.u32 %v953, %v977
        %v990 = vmul.u32 %v954, %v978
        %v991 = vmul.u32 %v955, %v979
        %v992 = vadd.s32 %v886, %v980
        %v993 = vadd.s32 %v887, %v981
        %v994 = vadd.s32 %v888, %v982
        %v995 = vadd.s32 %v889, %v983
        %v996 = vadd.s32 %v890, %v984
        %v997 = vadd.s32 %v891, %v985
        %v998 = vadd.s32 %v892, %v986
        %v999 = vadd.s32 %v893, %v987
        %v1000 = vadd.s32 %v894, %v988
        %v1001 = vadd.s32 %v895, %v989
        %v1002 = vadd.s32 %v896, %v990
        %v1003 = vadd.s32 %v897, %v991
        %v1004 = vadd.s32 %v944, %v968
        %v1005 = vadd.s32 %v945, %v969
        %v1006 = vadd.s32 %v946, %v970
        %v1007 = vadd.s32 %v947, %v971
        %v1008 = vadd.s32 %v948, %v972
        %v1009 = vadd.s32 %v949, %v973
        %v1010 = vadd.s32 %v950, %v974
        %v1011 = vadd.s32 %v951, %v975
        %v1012 = vadd.s32 %v952, %v976
        %v1013 = vadd.s32 %v953, %v977
        %v1014 = vadd.s32 %v954, %v978
        %v1015 = vadd.s32 %v955, %v979
        %v1016 = vadd.s32 %v910, %v1004
        %v1017 = vadd.s32 %v911, %v1005
        %v1018 = vadd.s32 %v912, %v1006
        %v1019 = vadd.s32 %v913, %v1007
        %v1020 = vadd.s32 %v914, %v1008
        %v1021 = vadd.s32 %v915, %v1009
        %v1022 = vadd.s32 %v916, %v1010
        %v1023 = vadd.s32 %v917, %v1011
        %v1024 = vadd.s32 %v918, %v1012
        %v1025 = vadd.s32 %v919, %v1013
        %v1026 = vadd.s32 %v920, %v1014
        %v1027 = vadd.s32 %v921, %v1015
        %p1028 = scmp.eq.s32.totalorder %s28, 0
        // Predicated region
        $region29: #{tpu_custom_call.1} parent=23 // pred_check
          %p1029 = pneg %p1028
        $region30: #{tpu_custom_call.1} parent=23 // pred_check_branch
          %1031 = sbr.rel (%p1029) target = $region32
        $region31: #{tpu_custom_call.1} parent=23 // pred_region
          %1032 = vst [vmem:[%s179] sm:$0xff] %v992
          %1033 = vst [vmem:[%s179 + $0x8] sm:$0xff] %v993
          %1034 = vst [vmem:[%s179 + $0x10] sm:$0xff] %v994
          %1035 = vst [vmem:[%s179 + $0x18] sm:$0xff] %v995
          %1036 = vst [vmem:[%s179 + $0x20] sm:$0xff] %v996
          %1037 = vst [vmem:[%s179 + $0x28] sm:$0xff] %v997
          %1038 = vst [vmem:[%s179 + $0x30] sm:$0xff] %v998
          %1039 = vst [vmem:[%s179 + $0x38] sm:$0xff] %v999
          %1040 = vst [vmem:[%s179 + $0x40] sm:$0xff] %v1000
          %1041 = vst [vmem:[%s179 + $0x48] sm:$0xff] %v1001
          %1042 = vst [vmem:[%s179 + $0x50] sm:$0xff] %v1002
          %1043 = vst [vmem:[%s179 + $0x58] sm:$0xff] %v1003
          %1044 = vst [vmem:[%s186] sm:$0xff] %v1016
          %1045 = vst [vmem:[%s186 + $0x8] sm:$0xff] %v1017
          %1046 = vst [vmem:[%s186 + $0x10] sm:$0xff] %v1018
          %1047 = vst [vmem:[%s186 + $0x18] sm:$0xff] %v1019
          %1048 = vst [vmem:[%s186 + $0x20] sm:$0xff] %v1020
          %1049 = vst [vmem:[%s186 + $0x28] sm:$0xff] %v1021
          %1050 = vst [vmem:[%s186 + $0x30] sm:$0xff] %v1022
          %1051 = vst [vmem:[%s186 + $0x38] sm:$0xff] %v1023
          %1052 = vst [vmem:[%s186 + $0x40] sm:$0xff] %v1024
          %1053 = vst [vmem:[%s186 + $0x48] sm:$0xff] %v1025
          %1054 = vst [vmem:[%s186 + $0x50] sm:$0xff] %v1026
          %1055 = vst [vmem:[%s186 + $0x58] sm:$0xff] %v1027
        $region32: #{tpu_custom_call.1} parent=23 // pred_fallthru
          _
        %p1056 = scmp.ne.s32.totalorder %s28, 0
        // Predicated region
        $region33: #{tpu_custom_call.1} parent=23 // pred_check
          %p1057 = pneg %p1056
        $region34: #{tpu_custom_call.1} parent=23 // pred_check_branch
          %1059 = sbr.rel (%p1057) target = $region36
        $region35: #{tpu_custom_call.1} parent=23 // pred_region
          %v1060 = vld [vmem:[%s179] sm:$0xff]
          %v1061 = vld [vmem:[%s179 + $0x8] sm:$0xff]
          %v1062 = vld [vmem:[%s179 + $0x10] sm:$0xff]
          %v1063 = vld [vmem:[%s179 + $0x18] sm:$0xff]
          %v1064 = vld [vmem:[%s179 + $0x20] sm:$0xff]
          %v1065 = vld [vmem:[%s179 + $0x28] sm:$0xff]
          %v1066 = vld [vmem:[%s179 + $0x30] sm:$0xff]
          %v1067 = vld [vmem:[%s179 + $0x38] sm:$0xff]
          %v1068 = vld [vmem:[%s179 + $0x40] sm:$0xff]
          %v1069 = vld [vmem:[%s179 + $0x48] sm:$0xff]
          %v1070 = vld [vmem:[%s179 + $0x50] sm:$0xff]
          %v1071 = vld [vmem:[%s179 + $0x58] sm:$0xff]
          %v1072 = vadd.s32 %v1060, %v992
          %v1073 = vadd.s32 %v1061, %v993
          %v1074 = vadd.s32 %v1062, %v994
          %v1075 = vadd.s32 %v1063, %v995
          %v1076 = vadd.s32 %v1064, %v996
          %v1077 = vadd.s32 %v1065, %v997
          %v1078 = vadd.s32 %v1066, %v998
          %v1079 = vadd.s32 %v1067, %v999
          %v1080 = vadd.s32 %v1068, %v1000
          %v1081 = vadd.s32 %v1069, %v1001
          %v1082 = vadd.s32 %v1070, %v1002
          %v1083 = vadd.s32 %v1071, %v1003
          %1084 = vst [vmem:[%s179] sm:$0xff] %v1072
          %1085 = vst [vmem:[%s179 + $0x8] sm:$0xff] %v1073
          %1086 = vst [vmem:[%s179 + $0x10] sm:$0xff] %v1074
          %1087 = vst [vmem:[%s179 + $0x18] sm:$0xff] %v1075
          %1088 = vst [vmem:[%s179 + $0x20] sm:$0xff] %v1076
          %1089 = vst [vmem:[%s179 + $0x28] sm:$0xff] %v1077
          %1090 = vst [vmem:[%s179 + $0x30] sm:$0xff] %v1078
          %1091 = vst [vmem:[%s179 + $0x38] sm:$0xff] %v1079
          %1092 = vst [vmem:[%s179 + $0x40] sm:$0xff] %v1080
          %1093 = vst [vmem:[%s179 + $0x48] sm:$0xff] %v1081
          %1094 = vst [vmem:[%s179 + $0x50] sm:$0xff] %v1082
          %1095 = vst [vmem:[%s179 + $0x58] sm:$0xff] %v1083
          %v1096 = vld [vmem:[%s186] sm:$0xff]
          %v1097 = vld [vmem:[%s186 + $0x8] sm:$0xff]
          %v1098 = vld [vmem:[%s186 + $0x10] sm:$0xff]
          %v1099 = vld [vmem:[%s186 + $0x18] sm:$0xff]
          %v1100 = vld [vmem:[%s186 + $0x20] sm:$0xff]
          %v1101 = vld [vmem:[%s186 + $0x28] sm:$0xff]
          %v1102 = vld [vmem:[%s186 + $0x30] sm:$0xff]
          %v1103 = vld [vmem:[%s186 + $0x38] sm:$0xff]
          %v1104 = vld [vmem:[%s186 + $0x40] sm:$0xff]
          %v1105 = vld [vmem:[%s186 + $0x48] sm:$0xff]
          %v1106 = vld [vmem:[%s186 + $0x50] sm:$0xff]
          %v1107 = vld [vmem:[%s186 + $0x58] sm:$0xff]
          %v1108 = vadd.s32 %v1096, %v1016
          %v1109 = vadd.s32 %v1097, %v1017
          %v1110 = vadd.s32 %v1098, %v1018
          %v1111 = vadd.s32 %v1099, %v1019
          %v1112 = vadd.s32 %v1100, %v1020
          %v1113 = vadd.s32 %v1101, %v1021
          %v1114 = vadd.s32 %v1102, %v1022
          %v1115 = vadd.s32 %v1103, %v1023
          %v1116 = vadd.s32 %v1104, %v1024
          %v1117 = vadd.s32 %v1105, %v1025
          %v1118 = vadd.s32 %v1106, %v1026
          %v1119 = vadd.s32 %v1107, %v1027
          %1120 = vst [vmem:[%s186] sm:$0xff] %v1108
          %1121 = vst [vmem:[%s186 + $0x8] sm:$0xff] %v1109
          %1122 = vst [vmem:[%s186 + $0x10] sm:$0xff] %v1110
          %1123 = vst [vmem:[%s186 + $0x18] sm:$0xff] %v1111
          %1124 = vst [vmem:[%s186 + $0x20] sm:$0xff] %v1112
          %1125 = vst [vmem:[%s186 + $0x28] sm:$0xff] %v1113
          %1126 = vst [vmem:[%s186 + $0x30] sm:$0xff] %v1114
          %1127 = vst [vmem:[%s186 + $0x38] sm:$0xff] %v1115
          %1128 = vst [vmem:[%s186 + $0x40] sm:$0xff] %v1116
          %1129 = vst [vmem:[%s186 + $0x48] sm:$0xff] %v1117
          %1130 = vst [vmem:[%s186 + $0x50] sm:$0xff] %v1118
          %1131 = vst [vmem:[%s186 + $0x58] sm:$0xff] %v1119
        $region36: #{tpu_custom_call.1} parent=23 // pred_fallthru
          _
        %s1132 = sand.u32 %s71, 1
        %s1133 = scalar_lea.sflag [#allocation4], %s1132
        %s1134 = sand.u32 %s71, 1
        %s1135 = smul.addr %s1134, 96
        %s1136 = scalar_lea.vmem [#allocation5], %s1135
        %s1137 = sand.u32 %s97, 1
        %s1138 = scalar_lea.sflag [#allocation7], %s1137
        %s1139 = sand.u32 %s97, 1
        %s1140 = smul.addr %s1139, 96
        %s1141 = scalar_lea.vmem [#allocation6], %s1140
        // Predicated region
        $region37: #{tpu_custom_call.1} parent=23 // pred_check
          %p1142 = pneg %p81
        $region38: #{tpu_custom_call.1} parent=23 // pred_check_branch
          %1144 = sbr.rel (%p1142) target = $region40
        $region39: #{tpu_custom_call.1} parent=23 // pred_region
          %s1145 = smul.u32 12, %s27
          %s1147 = ssub.s32 1536, 1536
          %1148 = vsyncadd %s1133, %s1147
          %s1149 = smul.addr %s1145, 128
          %s1150 = scalar_lea.hbm %s1, %s1149
          %s1151 = sshll.u32 %s1136, 4
          %s1152 = int_to_ptr.vmem [resolvable:$true] %s1151
          %1157 = dma.vmem_to_hbm [thread:$0]  %s1152, 1536, %s1150, %s1133, 128, 128, 8
        $region40: #{tpu_custom_call.1} parent=23 // pred_fallthru
          _
        // Predicated region
        $region41: #{tpu_custom_call.1} parent=23 // pred_check
          %p1158 = pneg %p107
        $region42: #{tpu_custom_call.1} parent=23 // pred_check_branch
          %1160 = sbr.rel (%p1158) target = $region44
        $region43: #{tpu_custom_call.1} parent=23 // pred_region
          %s1161 = smul.u32 12, %s27
          %s1163 = ssub.s32 1536, 1536
          %1164 = vsyncadd %s1138, %s1163
          %s1165 = smul.addr %s1161, 128
          %s1166 = scalar_lea.hbm %s2, %s1165
          %s1167 = sshll.u32 %s1141, 4
          %s1168 = int_to_ptr.vmem [resolvable:$true] %s1167
          %1173 = dma.vmem_to_hbm [thread:$0]  %s1168, 1536, %s1166, %s1138, 128, 128, 8
        $region44: #{tpu_custom_call.1} parent=23 // pred_fallthru
          _
      $region24: #{tpu_custom_call.1} parent=5 // pred_fallthru
        _
      %p1174 = scmp.le.s32.totalorder 2, %s18
      // Predicated region
      $region45: #{tpu_custom_call.1} parent=5 // pred_check
        %p1175 = pneg %p1174
      $region46: #{tpu_custom_call.1} parent=5 // pred_check_branch
        %1177 = sbr.rel (%p1175) target = $region48
      $region47: #{tpu_custom_call.1} parent=5 // pred_region
        %s1178 = ssub.s32 %s18, 2
        // Predicated region
        $region49: #{tpu_custom_call.1} parent=47 // pred_check
          %p1179 = pneg %p87
        $region50: #{tpu_custom_call.1} parent=47 // pred_check_branch
          %1181 = sbr.rel (%p1179) target = $region52
        $region51: #{tpu_custom_call.1} parent=47 // pred_region
          %s1182 = sand.u32 %s72, 1
          %s1183 = scalar_lea.sflag [#allocation4], %s1182
          %s1184 = sand.u32 %s72, 1
          %s1185 = smul.addr %s1184, 96
          %s1186 = scalar_lea.vmem [#allocation5], %s1185
          %1187 = dma.done %s1183, 1536
        $region52: #{tpu_custom_call.1} parent=47 // pred_fallthru
          _
        // Predicated region
        $region53: #{tpu_custom_call.1} parent=47 // pred_check
          %p1188 = pneg %p113
        $region54: #{tpu_custom_call.1} parent=47 // pred_check_branch
          %1190 = sbr.rel (%p1188) target = $region56
        $region55: #{tpu_custom_call.1} parent=47 // pred_region
          %s1191 = sand.u32 %s98, 1
          %s1192 = scalar_lea.sflag [#allocation7], %s1191
          %s1193 = sand.u32 %s98, 1
          %s1194 = smul.addr %s1193, 96
          %s1195 = scalar_lea.vmem [#allocation6], %s1194
          %1196 = dma.done %s1192, 1536
        $region56: #{tpu_custom_call.1} parent=47 // pred_fallthru
          _
      $region48: #{tpu_custom_call.1} parent=5 // pred_fallthru
        _
    $region6: #{tpu_custom_call.1} parent=1 // loop_footer
      %s22 = sadd.s32 1, %s18
    $region7: #{tpu_custom_call.1} parent=1 // loop_footer_branch
      %17 = sbr.rel target = $region3
    $region8: #{tpu_custom_call.1} parent=1 // loop_exit
      _
    %1197 = vsyncpa [#allocation3], 1
    %s1198 = scalar_lea.sflag [#allocation3], 1
    %1199 = vsyncpa %s1198, 1
    %1200 = vsyncpa [#allocation4], 1
    %s1201 = scalar_lea.sflag [#allocation4], 1
    %1202 = vsyncpa %s1201, 1
    %1203 = vsyncpa [#allocation7], 1
    %s1204 = scalar_lea.sflag [#allocation7], 1
    %1205 = vsyncpa %s1204, 1

</llo_original>
